<compile_context>
chip_gen: v5e
topology: v5e:2x2
jax: 0.10.0
libtpu: 0.0.40
codegen_flags: <defaults>
</compile_context>

<pallas_src>
import functools

import jax
import jax.numpy as jnp
from jax.experimental import pallas as pl
from jax.experimental.pallas import tpu as pltpu


def _round_up(v: int, m: int) -> int:
    return -(-v // m) * m


def layernorm_kernel(alpha_ref, bias_ref, x_ref, o_ref, *,
                     eps: float, feat: int, feat_padded: int,
                     bf16_out_math: bool, approx_recip: bool):
    """Normalizes a (block_rows, feat_padded) slab; stats over the first `feat` cols."""
    x = x_ref[...]                                   # (TR, Dp) in the input dtype
    xf = x.astype(jnp.float32)

    # Mean: padded columns are zero-filled by the wrapper, so a plain sum is exact.
    mean = jnp.sum(xf, axis=-1, keepdims=True) * (1.0 / feat)          # (TR, 1)

    d = xf - mean                                                      # (TR, Dp) f32
    if feat_padded != feat:
        col = jax.lax.broadcasted_iota(jnp.int32, (1, feat_padded), 1)
        d = jnp.where(col < feat, d, 0.0)
    # Unbiased variance (torch.std default) and eps added to std, exactly like torch.
    var = jnp.sum(d * d, axis=-1, keepdims=True) * (1.0 / (feat - 1))
    std = jnp.sqrt(var)

    alpha = alpha_ref[0]
    bias = bias_ref[0]
    # Fold scalar alpha into the per-row reciprocal: the big (TR, D) pass is a single
    # multiply-add.  approx=True moves the divide to the otherwise-idle EUP slot.
    inv = pl.reciprocal(std + eps, approx=approx_recip) * alpha        # (TR, 1)

    if bf16_out_math:
        # v6e/v7x: native bf16 VALU -> do the dominant elementwise pass in bf16
        # (halves vreg footprint); stats above were accumulated in f32.
        od = x.dtype
        out = (x - mean.astype(od)) * inv.astype(od) + bias.astype(od)
    else:
        out = d * inv + bias
    o_ref[...] = out.astype(o_ref.dtype)


def _chip_info():
    try:
        kind = jax.devices()[0].device_kind.lower()
    except Exception:  # pragma: no cover - defensive
        kind = ""
    try:
        vmem_cap = int(pltpu.get_tpu_info().vmem_capacity_bytes)
    except Exception:  # pragma: no cover - defensive
        vmem_cap = 128 * 1024 * 1024
    return kind, vmem_cap


def _choose_block_rows(rows: int, feat_padded: int, io_bytes: int,
                       block_budget_bytes: int) -> int:
    # Per-row VMEM cost of one pipeline stage:
    #   in  block, double-buffered : 2 * feat_p * io_bytes
    #   out block, double-buffered : 2 * feat_p * io_bytes
    #   ~2 full-block f32 temps    : 2 * feat_p * 4
    per_row = feat_padded * (4 * io_bytes + 8)
    cand = max(8, block_budget_bytes // per_row)
    # Keep >= ~8 grid steps when the problem allows so DMA/compute actually overlap.
    cand = min(cand, max(8, -(-rows // 8)))
    cand = min(cand, rows)
    cand = max(8, (cand // 8) * 8)            # sublane-aligned
    if cand >= rows:
        return rows                           # single block == full dim (always legal)
    return int(cand)


def layer_normalization(x, alpha, bias, *, eps: float = 1e-6,
                        block_rows: int | None = None,
                        approx_recip: bool = False):
    """Applies LayerNormalization over the last dim of x (any leading shape)."""
    orig_shape = x.shape
    feat = orig_shape[-1]
    rows = 1
    for dim in orig_shape[:-1]:
        rows *= dim

    kind, vmem_cap = _chip_info()
    io_bytes = jnp.dtype(x.dtype).itemsize

    # Lane-dense last dim: pad feat up to a multiple of 128 (reduction is masked in
    # the kernel) instead of letting Mosaic emit masked partial stores.
    feat_padded = _round_up(feat, 128)
    x2 = x.reshape(rows, feat)
    if feat_padded != feat:
        x2 = jnp.pad(x2, ((0, 0), (0, feat_padded - feat)))

    # VMEM-budget-driven tile size (auto-shrinks on v7x's 64 MiB VMEM/TC) and an
    # explicit scoped limit (v5e's default scoped limit is only 16 MiB).
    vmem_limit = min(int(vmem_cap * 0.75), vmem_cap - (4 << 20))
    block_budget = int(vmem_cap * 0.45)
    if block_rows is None:
        block_rows = _choose_block_rows(rows, feat_padded, io_bytes, block_budget)
    grid = (pl.cdiv(rows, block_rows),)

    # bf16 elementwise output pass only where the VPU has native bf16 (not v5e/older).
    bf16_out_math = (x.dtype == jnp.bfloat16
                     and not any(v in kind for v in ("v2", "v3", "v4", "v5")))
    # v7x has 2 TensorCores per chip: shard the (independent) row axis across them.
    semantics = (pltpu.CORE_PARALLEL,) if "v7" in kind else (pltpu.PARALLEL,)

    alpha = jnp.asarray(alpha, jnp.float32).reshape(1)
    bias = jnp.asarray(bias, jnp.float32).reshape(1)

    kernel = functools.partial(
        layernorm_kernel, eps=float(eps), feat=feat, feat_padded=feat_padded,
        bf16_out_math=bf16_out_math, approx_recip=approx_recip)

    out = pl.pallas_call(
        kernel,
        out_shape=jax.ShapeDtypeStruct((rows, feat_padded), x.dtype),
        grid=grid,
        in_specs=[
            pl.BlockSpec(memory_space=pltpu.MemorySpace.SMEM),        # alpha (1,)
            pl.BlockSpec(memory_space=pltpu.MemorySpace.SMEM),        # bias  (1,)
            pl.BlockSpec((block_rows, feat_padded), lambda i: (i, 0)),  # x rows
        ],
        out_specs=pl.BlockSpec((block_rows, feat_padded), lambda i: (i, 0)),
        compiler_params=pltpu.CompilerParams(
            dimension_semantics=semantics,
            vmem_limit_bytes=int(vmem_limit)),
    )(alpha, bias, x2)

    if feat_padded != feat:
        out = out[:, :feat]
    return out.reshape(orig_shape)


def reference_layernorm(x, alpha, bias, eps):
    """Plain-JAX mirror of the PyTorch forward (unbiased std, eps added to std)."""
    x = x.astype(jnp.float32)
    mean = jnp.mean(x, axis=-1, keepdims=True)
    std = jnp.std(x, axis=-1, keepdims=True, ddof=1)
    return alpha * (x - mean) / (std + eps) + bias


if __name__ == "__main__":
    eps = 1e-6
    key = jax.random.PRNGKey(0)
    k1, k2, k3 = jax.random.split(key, 3)

    # Module initializes alpha=1, bias=0; use non-trivial "trained" values so the
    # parameter path is actually exercised.
    alpha = jnp.asarray(1.5, jnp.float32)
    bias = jnp.asarray(-0.25, jnp.float32)

    # 1) f32, lane-dense feature dim (batch=2, seq=8, d_model=128), exact reciprocal.
    x1 = jax.random.normal(k1, (2, 8, 128), jnp.float32)
    o1 = jax.block_until_ready(layer_normalization(x1, alpha, bias, eps=eps))
    r1 = reference_layernorm(x1, alpha, bias, eps)
    assert o1.shape == x1.shape
    assert jnp.allclose(o1, r1, atol=1e-5, rtol=1e-5), "f32 mismatch vs reference"

    # 2) bf16 inputs (bf16 output math on v6e/v7x, f32 stats) + approx reciprocal.
    x2f = jax.random.normal(k2, (2, 16, 256), jnp.float32)
    x2 = x2f.astype(jnp.bfloat16)
    o2 = jax.block_until_ready(
        layer_normalization(x2, alpha, bias, eps=eps, approx_recip=True))
    r2 = reference_layernorm(x2.astype(jnp.float32), alpha, bias, eps)
    assert o2.dtype == jnp.bfloat16
    assert jnp.allclose(o2.astype(jnp.float32), r2, atol=3e-2, rtol=3e-2), \
        "bf16 mismatch vs reference"

    # 3) feature dim not a multiple of 128: wrapper pads to 128, kernel masks the
    #    reduction, output sliced back to the original width.
    x3 = jax.random.normal(k3, (2, 8, 96), jnp.float32)
    o3 = jax.block_until_ready(layer_normalization(x3, alpha, bias, eps=eps))
    r3 = reference_layernorm(x3, alpha, bias, eps)
    assert o3.shape == x3.shape
    assert jnp.allclose(o3, r3, atol=1e-5, rtol=1e-5), "padded-feat mismatch"

    print("KERNEL_OK")
</pallas_src>

<mosaic_0001>
module attributes {stable_mosaic.version = 11 : i64} {
  func.func @layernorm_kernel(%arg0: i32, %arg1: memref<1xf32, #tpu.memory_space<smem>>, %arg2: memref<1xf32, #tpu.memory_space<smem>>, %arg3: memref<8x128xf32, #tpu.memory_space<vmem>>, %arg4: memref<8x128xf32, #tpu.memory_space<vmem>>) attributes {dimension_semantics = [#tpu.dimension_semantics<parallel>], iteration_bounds = array<i64: 2>, scalar_prefetch = 0 : i64, scratch_operands = 0 : i64, tpu.core_type = #tpu.core_type<tc>, window_params = [{transform_indices = @transform_0, window_bounds = array<i64: 1>}, {transform_indices = @transform_1, window_bounds = array<i64: 1>}, {transform_indices = @transform_2, window_bounds = array<i64: 8, 128>}, {transform_indices = @transform_3, window_bounds = array<i64: 8, 128>}]} {
    %c0 = arith.constant 0 : index
    %c0_0 = arith.constant 0 : index
    %0 = vector.load %arg3[%c0, %c0_0] : memref<8x128xf32, #tpu.memory_space<vmem>>, vector<8x128xf32>
    %cst = arith.constant dense<0.000000e+00> : vector<8xf32>
    %1 = vector.multi_reduction <add>, %0, %cst [1] : vector<8x128xf32> to vector<8xf32>
    %2 = vector.shape_cast %1 : vector<8xf32> to vector<8x1xf32>
    %cst_1 = arith.constant 7.812500e-03 : f32
    %3 = vector.broadcast %cst_1 : f32 to vector<8x1xf32>
    %4 = arith.mulf %2, %3 : vector<8x1xf32>
    %5 = vector.broadcast %4 : vector<8x1xf32> to vector<8x128xf32>
    %6 = arith.subf %0, %5 : vector<8x128xf32>
    %7 = arith.mulf %6, %6 : vector<8x128xf32>
    %cst_2 = arith.constant dense<0.000000e+00> : vector<8xf32>
    %8 = vector.multi_reduction <add>, %7, %cst_2 [1] : vector<8x128xf32> to vector<8xf32>
    %9 = vector.shape_cast %8 : vector<8xf32> to vector<8x1xf32>
    %cst_3 = arith.constant 0.00787401571 : f32
    %10 = vector.broadcast %cst_3 : f32 to vector<8x1xf32>
    %11 = arith.mulf %9, %10 : vector<8x1xf32>
    %12 = math.sqrt %11 : vector<8x1xf32>
    %c0_4 = arith.constant 0 : index
    %13 = memref.load %arg1[%c0_4] : memref<1xf32, #tpu.memory_space<smem>>
    %c0_5 = arith.constant 0 : index
    %14 = memref.load %arg2[%c0_5] : memref<1xf32, #tpu.memory_space<smem>>
    %cst_6 = arith.constant 9.99999997E-7 : f32
    %15 = vector.broadcast %cst_6 : f32 to vector<8x1xf32>
    %16 = arith.addf %12, %15 : vector<8x1xf32>
    %17 = tpu.reciprocal %16 : vector<8x1xf32> -> vector<8x1xf32>
    %18 = vector.broadcast %13 : f32 to vector<8x1xf32>
    %19 = arith.mulf %17, %18 : vector<8x1xf32>
    %20 = vector.broadcast %19 : vector<8x1xf32> to vector<8x128xf32>
    %21 = arith.mulf %6, %20 : vector<8x128xf32>
    %22 = vector.broadcast %14 : f32 to vector<8x128xf32>
    %23 = arith.addf %21, %22 : vector<8x128xf32>
    %c0_7 = arith.constant 0 : index
    %c0_8 = arith.constant 0 : index
    %24 = vector.load %arg4[%c0_7, %c0_8] : memref<8x128xf32, #tpu.memory_space<vmem>>, vector<8x128xf32>
    tpu.vector_store %arg4[%c0_7, %c0_8], %23 {strides = array<i32>} : memref<8x128xf32, #tpu.memory_space<vmem>>, vector<8x128xf32>,
    return
  }
  func.func @transform_0(%arg0: i32) -> i32 {
    %c0_i32 = arith.constant 0 : i32
    %c0_i32_0 = arith.constant 0 : i32
    return %c0_i32 : i32
  }
  func.func @transform_1(%arg0: i32) -> i32 {
    %c0_i32 = arith.constant 0 : i32
    %c0_i32_0 = arith.constant 0 : i32
    return %c0_i32 : i32
  }
  func.func @transform_2(%arg0: i32) -> (i32, i32) {
    %c0_i32 = arith.constant 0 : i32
    %c0_i32_0 = arith.constant 0 : i32
    return %arg0, %c0_i32 : i32, i32
  }
  func.func @transform_3(%arg0: i32) -> (i32, i32) {
    %c0_i32 = arith.constant 0 : i32
    %c0_i32_0 = arith.constant 0 : i32
    return %arg0, %c0_i32 : i32, i32
  }
}

</mosaic_0001>

<llo_original>
// kernel: tpu_custom_call.1
$region0: #{tpu_custom_call.1}
  #allocation0 [shape = 'u32[]', space=smem, size = 0x4, offset = 0x4, fixed_abs, tag = 'smem constant byte address 0x4 - core index']
  #allocation1 [shape = 'u32[72,128]{1,0:T(1,128)}', space=vmem, size = 0x9000, scoped, tag = 'internal scratch']
  #allocation2 [shape = 'f32[1]{0:T(128)S(6)}', space=smem, size = 0x200, scoped, tag = 'scoped memory for tpu_custom_call.1']
  #allocation3 [shape = 'f32[1]{0:T(128)S(6)}', space=smem, size = 0x200, scoped, tag = 'scoped memory for tpu_custom_call.1']
  %s0 = inlined_call_operand.<no memory space> [shape: f32[1], index: 0, kind: input, shape index: {}]
  %s1 = inlined_call_operand.<no memory space> [shape: f32[1], index: 1, kind: input, shape index: {}]
  %s2 = inlined_call_operand.hbm [shape: f32[16,128], index: 2, kind: input, shape index: {}]
  %s3 = inlined_call_operand.hbm [shape: f32[16,128], index: 3, kind: output, shape index: {}]
  %s4 = sld [smem:[#allocation0]]
  $region49: #{tpu_custom_call.1} parent=0
    _
  %s6 = ssub.s32 1, %s4
  %s7 = scalar_select 0, %s6, %s4
  %8 = sst [smem:[#allocation2]] %s0
  %9 = sst [smem:[#allocation3]] %s1
  $region1: #{tpu_custom_call.1} parent=0
    #allocation4 [shape = 'u8[8192]{0}', space=vmem, size = 0x2000, scoped, tag = 'input window, operand 2']
    #allocation5 [shape = 's32[2]{0}', space=sflag, size = 0x8, scoped, tag = 'scoped memory for tpu_custom_call.1']
    #allocation6 [shape = 's32[2]{0}', space=sflag, size = 0x8, scoped, tag = 'scoped memory for tpu_custom_call.1']
    #allocation7 [shape = 'u8[8192]{0}', space=vmem, size = 0x2000, scoped, tag = 'output window, operand 0']
    %10 = vsyncpa [#allocation5], 0
    %s11 = scalar_lea.sflag [#allocation5], 1
    %12 = vsyncpa %s11, 0
    %13 = vsyncpa [#allocation6], 0
    %s14 = scalar_lea.sflag [#allocation6], 1
    %15 = vsyncpa %s14, 0
    loop: start=0, step=1, limit=4
    $region2: #{tpu_custom_call.1} parent=1 // loop_pre_header
      _
    $region3: #{tpu_custom_call.1} parent=1 // loop_header
      %s17 = sphi 0, %s21
      %p18 = scmp.ge.s32.totalorder %s17, 4
      %s25 = sphi 0, %s25
      %s27 = sphi 0, %s25
      %s28 = sphi 0, %s27
      %s42 = sphi 0, %s28
      %s46 = sphi 0, %s46
      %s48 = sphi 0, %s46
      %s49 = sphi 0, %s48
      %s63 = sphi 0, %s49
      %s69 = sphi 0, %s71
      %s72 = sphi 0, %s69
      %s73 = sphi 0, %s72
      %s89 = sphi 0, %s73
      %s95 = sphi 0, %s97
      %s98 = sphi 0, %s95
      %s99 = sphi 0, %s98
      %s115 = sphi 0, %s99
    $region4: #{tpu_custom_call.1} parent=1 // loop_header_branch
      %20 = sbr.rel (%p18) target = $region8
    $region5: #{tpu_custom_call.1} parent=1 // loop_body
      %s22 = ssub.s32 %s17, 1
      %s23 = ssub.s32 %s17, 2
      %s24 = sadd.s32 %s17, 1
      %s26 = sadd.s32 %s25, 1
      %p29 = scmp.eq.s32.totalorder %s17, 1
      %p30 = scmp.ne.s32.totalorder %s25, %s27
      %p31 = scmp.eq.s32.totalorder %s17, 0
      %p32 = por %p30, %p31
      %p33 = scmp.ne.s32.totalorder %s25, %s27
      %p34 = scmp.eq.s32.totalorder %s22, 1
      %p35 = por %p33, %p34
      %p36 = scmp.ne.s32.totalorder %s27, %s28
      %p37 = scmp.eq.s32.totalorder %s22, 0
      %p38 = por %p36, %p37
      %p39 = scmp.ne.s32.totalorder %s27, %s28
      %p40 = scmp.eq.s32.totalorder %s23, 1
      %p41 = por %p39, %p40
      %p43 = scmp.ne.s32.totalorder %s28, %s42
      %p44 = scmp.eq.s32.totalorder %s23, 0
      %p45 = por %p43, %p44
      %s47 = sadd.s32 %s46, 1
      %p50 = scmp.eq.s32.totalorder %s17, 1
      %p51 = scmp.ne.s32.totalorder %s46, %s48
      %p52 = scmp.eq.s32.totalorder %s17, 0
      %p53 = por %p51, %p52
      %p54 = scmp.ne.s32.totalorder %s46, %s48
      %p55 = scmp.eq.s32.totalorder %s22, 1
      %p56 = por %p54, %p55
      %p57 = scmp.ne.s32.totalorder %s48, %s49
      %p58 = scmp.eq.s32.totalorder %s22, 0
      %p59 = por %p57, %p58
      %p60 = scmp.ne.s32.totalorder %s48, %s49
      %p61 = scmp.eq.s32.totalorder %s23, 1
      %p62 = por %p60, %p61
      %p64 = scmp.ne.s32.totalorder %s49, %s63
      %p65 = scmp.eq.s32.totalorder %s23, 0
      %p66 = por %p64, %p65
      %s67 = ssub.s32 %s17, %s24
      %p68 = scmp.eq.s32.totalorder %s67, 0
      %s70 = sadd.s32 %s69, 1
      %s71 = scalar_select %p68, %s69, %s70
      %p74 = pneg %p68
      %p75 = scmp.eq.s32.totalorder %s17, 1
      %p76 = por %p74, %p75
      %p77 = scmp.ne.s32.totalorder %s69, %s72
      %p78 = scmp.eq.s32.totalorder %s17, 0
      %p79 = por %p77, %p78
      %p80 = scmp.ne.s32.totalorder %s69, %s72
      %p81 = scmp.eq.s32.totalorder %s22, 1
      %p82 = por %p80, %p81
      %p83 = scmp.ne.s32.totalorder %s72, %s73
      %p84 = scmp.eq.s32.totalorder %s22, 0
      %p85 = por %p83, %p84
      %p86 = scmp.ne.s32.totalorder %s72, %s73
      %p87 = scmp.eq.s32.totalorder %s23, 1
      %p88 = por %p86, %p87
      %p90 = scmp.ne.s32.totalorder %s73, %s89
      %p91 = scmp.eq.s32.totalorder %s23, 0
      %p92 = por %p90, %p91
      %s93 = ssub.s32 %s17, %s24
      %p94 = scmp.eq.s32.totalorder %s93, 0
      %s96 = sadd.s32 %s95, 1
      %s97 = scalar_select %p94, %s95, %s96
      %p100 = pneg %p94
      %p101 = scmp.eq.s32.totalorder %s17, 1
      %p102 = por %p100, %p101
      %p103 = scmp.ne.s32.totalorder %s95, %s98
      %p104 = scmp.eq.s32.totalorder %s17, 0
      %p105 = por %p103, %p104
      %p106 = scmp.ne.s32.totalorder %s95, %s98
      %p107 = scmp.eq.s32.totalorder %s22, 1
      %p108 = por %p106, %p107
      %p109 = scmp.ne.s32.totalorder %s98, %s99
      %p110 = scmp.eq.s32.totalorder %s22, 0
      %p111 = por %p109, %p110
      %p112 = scmp.ne.s32.totalorder %s98, %s99
      %p113 = scmp.eq.s32.totalorder %s23, 1
      %p114 = por %p112, %p113
      %p116 = scmp.ne.s32.totalorder %s99, %s115
      %p117 = scmp.eq.s32.totalorder %s23, 0
      %p118 = por %p116, %p117
      %p119 = scmp.le.s32.totalorder 1, %s17
      %p120 = scmp.lt.s32.totalorder %s17, 3
      %p121 = pnand %p119, %p120
      %p122 = pneg %p121
      // Predicated region
      $region9: #{tpu_custom_call.1} parent=5 // pred_check
        _
      $region10: #{tpu_custom_call.1} parent=5 // pred_check_branch
        %124 = sbr.rel (%p121) target = $region12
      $region11: #{tpu_custom_call.1} parent=5 // pred_region
        %s125 = ssub.s32 %s17, 1
        // Predicated region
        $region13: #{tpu_custom_call.1} parent=11 // pred_check
          %p126 = pneg %p38
        $region14: #{tpu_custom_call.1} parent=11 // pred_check_branch
          %128 = sbr.rel (%p126) target = $region16
        $region15: #{tpu_custom_call.1} parent=11 // pred_region
          _
        $region16: #{tpu_custom_call.1} parent=11 // pred_fallthru
          _
        // Predicated region
        $region17: #{tpu_custom_call.1} parent=11 // pred_check
          %p129 = pneg %p59
        $region18: #{tpu_custom_call.1} parent=11 // pred_check_branch
          %131 = sbr.rel (%p129) target = $region20
        $region19: #{tpu_custom_call.1} parent=11 // pred_region
          _
        $region20: #{tpu_custom_call.1} parent=11 // pred_fallthru
          _
      $region12: #{tpu_custom_call.1} parent=5 // pred_fallthru
        _
      %p132 = scmp.lt.s32.totalorder %s17, 2
      // Predicated region
      $region21: #{tpu_custom_call.1} parent=5 // pred_check
        %p133 = pneg %p132
      $region22: #{tpu_custom_call.1} parent=5 // pred_check_branch
        %135 = sbr.rel (%p133) target = $region24
      $region23: #{tpu_custom_call.1} parent=5 // pred_region
        // Predicated region
        $region25: #{tpu_custom_call.1} parent=23 // pred_check
          %p136 = pneg %p79
        $region26: #{tpu_custom_call.1} parent=23 // pred_check_branch
          %138 = sbr.rel (%p136) target = $region28
        $region27: #{tpu_custom_call.1} parent=23 // pred_region
          %s139 = sand.u32 %s69, 1
          %s140 = scalar_lea.sflag [#allocation5], %s139
          %s141 = sand.u32 %s69, 1
          %s142 = smul.addr %s141, 8
          %s143 = scalar_lea.vmem [#allocation4], %s142
          %145 = vsyncadd %s140, 0
          %s146 = smul.addr %s17, 8
          %s147 = scalar_lea.hbm %s2, %s146
          %s149 = sshll.u32 %s147, 4
          %s150 = int_to_ptr.hbm [resolvable:$true] %s149
          %s151 = sshll.u32 %s143, 4
          %s152 = int_to_ptr.vmem [resolvable:$true] %s151
          %154 = dma.hbm_to_vmem [thread:$0]  %s150, 128, %s152, %s140
        $region28: #{tpu_custom_call.1} parent=23 // pred_fallthru
          _
      $region24: #{tpu_custom_call.1} parent=5 // pred_fallthru
        _
      %p155 = scmp.le.s32.totalorder 1, %s17
      %p156 = scmp.lt.s32.totalorder %s17, 3
      %p157 = pnand %p155, %p156
      %p158 = pneg %p157
      // Predicated region
      $region29: #{tpu_custom_call.1} parent=5 // pred_check
        _
      $region30: #{tpu_custom_call.1} parent=5 // pred_check_branch
        %160 = sbr.rel (%p157) target = $region32
      $region31: #{tpu_custom_call.1} parent=5 // pred_region
        %s161 = ssub.s32 %s17, 1
        %s162 = sand.u32 %s72, 1
        %s163 = scalar_lea.sflag [#allocation5], %s162
        %s164 = sand.u32 %s72, 1
        %s165 = smul.addr %s164, 8
        %s166 = scalar_lea.vmem [#allocation4], %s165
        // Predicated region
        $region33: #{tpu_custom_call.1} parent=31 // pred_check
          %p167 = pneg %p85
        $region34: #{tpu_custom_call.1} parent=31 // pred_check_branch
          %169 = sbr.rel (%p167) target = $region36
        $region35: #{tpu_custom_call.1} parent=31 // pred_region
          %171 = dma.done %s163, 128
        $region36: #{tpu_custom_call.1} parent=31 // pred_fallthru
          _
        %p172 = pneg %p38
        %p173 = pneg %p35
        %p174 = pneg %p59
        %p175 = pneg %p56
        %s176 = sand.u32 %s72, 1
        %s177 = scalar_lea.sflag [#allocation5], %s176
        %s178 = sand.u32 %s72, 1
        %s179 = smul.addr %s178, 8
        %s180 = scalar_lea.vmem [#allocation4], %s179
        %p181 = pneg %p85
        %p182 = pneg %p82
        %p183 = pneg %p111
        %p184 = pneg %p108
        %s185 = sand.u32 %s98, 1
        %s186 = scalar_lea.sflag [#allocation6], %s185
        %s187 = sand.u32 %s98, 1
        %s188 = smul.addr %s187, 8
        %s189 = scalar_lea.vmem [#allocation7], %s188
        %v190 = vld [vmem:[%s166] sm:$0xff]
        %191 = vadd.xlane.f32.xlu0 %v190
        %v192 = vpop.xlane.xlu0 %191
        %v193 = vmul.f32 %v192, 0.0078125
        %v194 = vsub.f32 %v190, %v193
        %v195 = vmul.f32 %v194, %v194
        %196 = vadd.xlane.f32.xlu0 %v195
        %v197 = vpop.xlane.xlu0 %196
        %v198 = vmul.f32 %v197, 0.007874016
        %v199 = vrsqrt.pop %v198
        %v200 = vmul.f32 %v199, %v198
        %v201 = vmul.f32 %v200, %v199
        %v202 = vmul.f32 0.5, %v201
        %v203 = vsub.f32 1.5, %v202
        %v204 = vmul.f32 %v199, %v203
        %v205 = vmul.f32 %v198, %v204
        %vm206 = vcmp.eq.f32.partialorder %v198, inf
        %v207 = vsel %vm206, %v198, %v205
        %vm208 = vcmp.eq.f32.partialorder %v198, 0.0
        %v209 = vand.u32 %v198, 2147483648
        %v210 = vsel %vm208, %v209, %v207
        %s211 = sld [smem:[#allocation2]]
        %s212 = sld [smem:[#allocation3]]
        %v213 = vadd.f32 %v210, 1e-06
        %v214 = vrcp.pop %v213
        %v215 = vmul.f32 %v213, %v214
        %v216 = vsub.f32 1.0, %v215
        %v217 = vmul.f32 %v214, %v216
        %v218 = vadd.f32 %v214, %v217
        %vm219 = vweird.f32 %v213
        %vm220 = vweird.f32 %v214
        %vm221 = vmor %vm219, %vm220
        %v222 = vsel %vm221, %v214, %v218
        %v223 = vand.u32 2147483647, %v213
        %vm224 = vcmp.eq.f32.partialorder %v223, 8.507059e+37
        %v225 = vand.u32 %v213, 2147483648
        %v226 = vor.u32 1.1754944e-38, %v225
        %v227 = vsel %vm224, %v226, %v222
        %v228 = vstv %s211
        %v229 = vmul.f32 %v227, %v228
        %v230 = vmul.f32 %v194, %v229
        %v231 = vstv %s212
        %v232 = vadd.f32 %v230, %v231
        %233 = vst [vmem:[%s189] sm:$0xff] %v232
        %s234 = sand.u32 %s98, 1
        %s235 = scalar_lea.sflag [#allocation6], %s234
        %s236 = sand.u32 %s98, 1
        %s237 = smul.addr %s236, 8
        %s238 = scalar_lea.vmem [#allocation7], %s237
        // Predicated region
        $region37: #{tpu_custom_call.1} parent=31 // pred_check
          %p239 = pneg %p108
        $region38: #{tpu_custom_call.1} parent=31 // pred_check_branch
          %241 = sbr.rel (%p239) target = $region40
        $region39: #{tpu_custom_call.1} parent=31 // pred_region
          %243 = vsyncadd %s235, 0
          %s244 = smul.addr %s22, 8
          %s245 = scalar_lea.hbm %s3, %s244
          %s247 = sshll.u32 %s238, 4
          %s248 = int_to_ptr.vmem [resolvable:$true] %s247
          %s249 = sshll.u32 %s245, 4
          %s250 = int_to_ptr.hbm [resolvable:$true] %s249
          %252 = dma.vmem_to_hbm [thread:$0]  %s248, 128, %s250, %s235
        $region40: #{tpu_custom_call.1} parent=31 // pred_fallthru
          _
      $region32: #{tpu_custom_call.1} parent=5 // pred_fallthru
        _
      %p253 = scmp.le.s32.totalorder 2, %s17
      // Predicated region
      $region41: #{tpu_custom_call.1} parent=5 // pred_check
        %p254 = pneg %p253
      $region42: #{tpu_custom_call.1} parent=5 // pred_check_branch
        %256 = sbr.rel (%p254) target = $region44
      $region43: #{tpu_custom_call.1} parent=5 // pred_region
        %s257 = ssub.s32 %s17, 2
        // Predicated region
        $region45: #{tpu_custom_call.1} parent=43 // pred_check
          %p258 = pneg %p114
        $region46: #{tpu_custom_call.1} parent=43 // pred_check_branch
          %260 = sbr.rel (%p258) target = $region48
        $region47: #{tpu_custom_call.1} parent=43 // pred_region
          %s261 = sand.u32 %s99, 1
          %s262 = scalar_lea.sflag [#allocation6], %s261
          %s263 = sand.u32 %s99, 1
          %s264 = smul.addr %s263, 8
          %s265 = scalar_lea.vmem [#allocation7], %s264
          %267 = dma.done %s262, 128
        $region48: #{tpu_custom_call.1} parent=43 // pred_fallthru
          _
      $region44: #{tpu_custom_call.1} parent=5 // pred_fallthru
        _
    $region6: #{tpu_custom_call.1} parent=1 // loop_footer
      %s21 = sadd.s32 1, %s17
    $region7: #{tpu_custom_call.1} parent=1 // loop_footer_branch
      %16 = sbr.rel target = $region3
    $region8: #{tpu_custom_call.1} parent=1 // loop_exit
      _
    %268 = vsyncpa [#allocation5], 1
    %s269 = scalar_lea.sflag [#allocation5], 1
    %270 = vsyncpa %s269, 1
    %271 = vsyncpa [#allocation6], 1
    %s272 = scalar_lea.sflag [#allocation6], 1
    %273 = vsyncpa %s272, 1

</llo_original>
